<compile_context>
chip_gen: v7x
topology: tpu7x:2x2x1
jax: 0.10.0
libtpu: 0.0.40
codegen_flags: <defaults>
</compile_context>

<pallas_src>
import jax
import jax.numpy as jnp
from jax.experimental import pallas as pl
from jax.experimental.pallas import tpu as pltpu


def mlp_kernel(p_ref, x_ref, o_ref):
    # p_ref: SMEM (5,) f32 = [w1_00, w1_01, b1, w2_00, b2]
    # x_ref: VMEM (2, TILE_B) f32  -- batch on the lane axis (lane-dense)
    # o_ref: VMEM (1, TILE_B) f32
    x = x_ref[...]                                        # (2, TILE_B)
    h = p_ref[0] * x[0:1, :] + p_ref[1] * x[1:2, :] + p_ref[2]   # (1, TILE_B)
    h = jnp.maximum(h, jnp.float32(0.0))                  # ReLU
    o_ref[...] = h * p_ref[3] + p_ref[4]                  # output Linear(1->1)


def simple_network_forward(x, w1, b1, w2, b2, *, max_tile_b=8192):
    """x: (B, 2) f32 -> (B, 1) f32, matching the PyTorch module."""
    B = x.shape[0]

    # Lane-dense tile of the batch: multiple of 128 lanes, capped for huge B.
    tile_b = min(max_tile_b, ((B + 127) // 128) * 128)
    num_tiles = pl.cdiv(B, tile_b)
    b_pad = num_tiles * tile_b

    # Transposed, zero-padded slab: features on sublanes, batch on lanes.
    x_t = jnp.zeros((2, b_pad), jnp.float32).at[:, :B].set(x.T.astype(jnp.float32))

    # Flatten all parameters into one tiny SMEM vector.
    params = jnp.concatenate([
        w1.reshape(-1), b1.reshape(-1), w2.reshape(-1), b2.reshape(-1)
    ]).astype(jnp.float32)                                # (5,)

    out = pl.pallas_call(
        mlp_kernel,
        out_shape=jax.ShapeDtypeStruct((1, b_pad), jnp.float32),
        grid=(num_tiles,),
        in_specs=[
            pl.BlockSpec(memory_space=pltpu.MemorySpace.SMEM),        # params
            pl.BlockSpec((2, tile_b), lambda i: (0, i)),              # x_t tile
        ],
        out_specs=pl.BlockSpec((1, tile_b), lambda i: (0, i)),
        compiler_params=pltpu.CompilerParams(
            dimension_semantics=("parallel",)),
    )(params, x_t)

    # Drop padding lanes, restore PyTorch (B, 1) output shape.
    return out[0, :B].reshape(B, 1)


def init_params(key):
    # Mimic nn.Linear default init: U(-1/sqrt(fan_in), 1/sqrt(fan_in)).
    k1, k2, k3, k4 = jax.random.split(key, 4)
    bound1 = 1.0 / jnp.sqrt(2.0)
    bound2 = 1.0
    w1 = jax.random.uniform(k1, (1, 2), jnp.float32, -bound1, bound1)
    b1 = jax.random.uniform(k2, (1,), jnp.float32, -bound1, bound1)
    w2 = jax.random.uniform(k3, (1, 1), jnp.float32, -bound2, bound2)
    b2 = jax.random.uniform(k4, (1,), jnp.float32, -bound2, bound2)
    return w1, b1, w2, b2


if __name__ == "__main__":
    key = jax.random.PRNGKey(0)
    kx, kp = jax.random.split(key)
    B = 8
    x = jax.random.normal(kx, (B, 2), jnp.float32)
    w1, b1, w2, b2 = init_params(kp)

    y = simple_network_forward(x, w1, b1, w2, b2)
    y = jax.block_until_ready(y)

    # Pure-JAX reference (same semantics as the PyTorch module).
    h_ref = jnp.maximum(x @ w1.T + b1, 0.0)
    y_ref = h_ref @ w2.T + b2
    assert y.shape == (B, 1)
    assert jnp.allclose(y, y_ref, atol=1e-6), "mismatch vs reference"

    print("KERNEL_OK")
</pallas_src>

<mosaic_0001>
module attributes {stable_mosaic.version = 11 : i64} {
  func.func @mlp_kernel(%arg0: i32, %arg1: memref<5xf32, #tpu.memory_space<smem>>, %arg2: memref<2x128xf32, #tpu.memory_space<vmem>>, %arg3: memref<1x128xf32, #tpu.memory_space<vmem>>) attributes {dimension_semantics = [#tpu.dimension_semantics<parallel>], iteration_bounds = array<i64: 1>, scalar_prefetch = 0 : i64, scratch_operands = 0 : i64, tpu.core_type = #tpu.core_type<tc>, window_params = [{transform_indices = @transform_0, window_bounds = array<i64: 5>}, {transform_indices = @transform_1, window_bounds = array<i64: 2, 128>}, {transform_indices = @transform_2, window_bounds = array<i64: 1, 128>}]} {
    %c0 = arith.constant 0 : index
    %c0_0 = arith.constant 0 : index
    %0 = vector.load %arg2[%c0, %c0_0] : memref<2x128xf32, #tpu.memory_space<vmem>>, vector<2x128xf32>
    %c0_1 = arith.constant 0 : index
    %1 = memref.load %arg1[%c0_1] : memref<5xf32, #tpu.memory_space<smem>>
    %2 = vector.extract_strided_slice %0 {offsets = [0, 0], sizes = [1, 128], strides = [1, 1]} : vector<2x128xf32> to vector<1x128xf32>
    %3 = vector.broadcast %1 : f32 to vector<1x128xf32>
    %4 = arith.mulf %3, %2 : vector<1x128xf32>
    %c1 = arith.constant 1 : index
    %5 = memref.load %arg1[%c1] : memref<5xf32, #tpu.memory_space<smem>>
    %6 = vector.extract_strided_slice %0 {offsets = [1, 0], sizes = [1, 128], strides = [1, 1]} : vector<2x128xf32> to vector<1x128xf32>
    %7 = vector.broadcast %5 : f32 to vector<1x128xf32>
    %8 = arith.mulf %7, %6 : vector<1x128xf32>
    %9 = arith.addf %4, %8 : vector<1x128xf32>
    %c2 = arith.constant 2 : index
    %10 = memref.load %arg1[%c2] : memref<5xf32, #tpu.memory_space<smem>>
    %11 = vector.broadcast %10 : f32 to vector<1x128xf32>
    %12 = arith.addf %9, %11 : vector<1x128xf32>
    %cst = arith.constant 0.000000e+00 : f32
    %13 = vector.broadcast %cst : f32 to vector<1x128xf32>
    %14 = arith.maximumf %12, %13 : vector<1x128xf32>
    %c3 = arith.constant 3 : index
    %15 = memref.load %arg1[%c3] : memref<5xf32, #tpu.memory_space<smem>>
    %16 = vector.broadcast %15 : f32 to vector<1x128xf32>
    %17 = arith.mulf %14, %16 : vector<1x128xf32>
    %c4 = arith.constant 4 : index
    %18 = memref.load %arg1[%c4] : memref<5xf32, #tpu.memory_space<smem>>
    %19 = vector.broadcast %18 : f32 to vector<1x128xf32>
    %20 = arith.addf %17, %19 : vector<1x128xf32>
    %c0_2 = arith.constant 0 : index
    %c0_3 = arith.constant 0 : index
    %21 = vector.load %arg3[%c0_2, %c0_3] : memref<1x128xf32, #tpu.memory_space<vmem>>, vector<1x128xf32>
    tpu.vector_store %arg3[%c0_2, %c0_3], %20 {strides = array<i32>} : memref<1x128xf32, #tpu.memory_space<vmem>>, vector<1x128xf32>,
    return
  }
  func.func @transform_0(%arg0: i32) -> i32 {
    %c0_i32 = arith.constant 0 : i32
    %c0_i32_0 = arith.constant 0 : i32
    return %c0_i32 : i32
  }
  func.func @transform_1(%arg0: i32) -> (i32, i32) {
    %c0_i32 = arith.constant 0 : i32
    %c0_i32_0 = arith.constant 0 : i32
    return %c0_i32, %arg0 : i32, i32
  }
  func.func @transform_2(%arg0: i32) -> (i32, i32) {
    %c0_i32 = arith.constant 0 : i32
    %c0_i32_0 = arith.constant 0 : i32
    return %c0_i32, %arg0 : i32, i32
  }
}

</mosaic_0001>

<llo_original>
// kernel: tpu_custom_call.1
$region0: #{tpu_custom_call.1}
  #allocation0 [shape = 'u32[]', space=smem, size = 0x4, offset = 0x4, fixed_abs, tag = 'smem constant byte address 0x4 - core index']
  #allocation1 [shape = 'u32[144,128]{1,0:T(1,128)}', space=vmem, size = 0x12000, scoped, tag = 'internal scratch']
  %s0 = inlined_call_operand.hbm [shape: f32[5], index: 0, kind: input, shape index: {}]
  %s1 = inlined_call_operand.vmem [shape: f32[2,128], index: 1, kind: input, shape index: {}]
  %s2 = inlined_call_operand.hbm [shape: f32[1,128], index: 2, kind: output, shape index: {}]
  %s3 = sld [smem:[#allocation0]]
  $region22: #{tpu_custom_call.1} parent=0
    _
  %s5 = ssub.s32 1, %s3
  %s6 = scalar_select 0, %s5, %s3
  $region1: #{tpu_custom_call.1} parent=0
    #allocation2 [shape = 'u8[512]{0}', space=smem, size = 0x200, scoped, tag = 'input window, operand 0, single buffered']
    #allocation3 [shape = 's32[1]{0}', space=sflag, size = 0x4, scoped, tag = 'scoped memory for tpu_custom_call.1']
    #allocation4 [shape = 's32[1]{0}', space=sflag, size = 0x4, scoped, tag = 'scoped memory for tpu_custom_call.1']
    #allocation5 [shape = 'u8[512]{0}', space=vmem, size = 0x400, scoped, tag = 'output window, operand 0, single buffered']
    %7 = vsyncpa [#allocation4], 0
    %8 = vsyncpa [#allocation3], 0
    // Predicated region
    $region2: #{tpu_custom_call.1} parent=1 // pred_check
      _
    $region3: #{tpu_custom_call.1} parent=1 // pred_check_branch
      %10 = sbr.rel (0) target = $region5
    $region4: #{tpu_custom_call.1} parent=1 // pred_region
      %s12 = ssub.s32 16, 16
      %13 = vsyncadd [#allocation4], %s12
      %16 = dma.hbm_to_smem %s0, 16, [#allocation2], [#allocation4]
    $region5: #{tpu_custom_call.1} parent=1 // pred_fallthru
      _
    // Predicated region
    $region6: #{tpu_custom_call.1} parent=1 // pred_check
      _
    $region7: #{tpu_custom_call.1} parent=1 // pred_check_branch
      %18 = sbr.rel (0) target = $region9
    $region8: #{tpu_custom_call.1} parent=1 // pred_region
      _
    $region9: #{tpu_custom_call.1} parent=1 // pred_fallthru
      _
    // Predicated region
    $region10: #{tpu_custom_call.1} parent=1 // pred_check
      _
    $region11: #{tpu_custom_call.1} parent=1 // pred_check_branch
      %20 = sbr.rel (0) target = $region13
    $region12: #{tpu_custom_call.1} parent=1 // pred_region
      %21 = dma.done [#allocation4], 16
    $region13: #{tpu_custom_call.1} parent=1 // pred_fallthru
      _
    %22 = sfence
    %v23 = vld [vmem:[%s1] sm:$0x3]
    %s24 = sld [smem:[#allocation2]]
    %v25 = vstv %s24
    %v26 = vmul.f32 %v25, %v23
    %s27 = sld [smem:[#allocation2 + $0x1]]
    %v28 = vstv %s27
    %v29 = vmul.f32 %v28, %v23
    %v31 = vrot.slane %v29, 1
    %v33 = vadd.f32 %v26, %v31
    %s34 = sld [smem:[#allocation2 + $0x2]]
    %v35 = vstv %s34
    %v36 = vadd.f32 %v33, %v35
    %v37 = vmax.f32 %v36, 0.0
    %s38 = sld [smem:[#allocation2 + $0x3]]
    %v39 = vstv %s38
    %v40 = vmul.f32 %v37, %v39
    %s41 = sld [smem:[#allocation2 + $0x4]]
    %v42 = vstv %s41
    %v43 = vadd.f32 %v40, %v42
    %44 = vst [vmem:[#allocation5] sm:$0x1] %v43
    // Predicated region
    $region14: #{tpu_custom_call.1} parent=1 // pred_check
      _
    $region15: #{tpu_custom_call.1} parent=1 // pred_check_branch
      %46 = sbr.rel (0) target = $region17
    $region16: #{tpu_custom_call.1} parent=1 // pred_region
      %s48 = ssub.s32 16, 16
      %49 = vsyncadd [#allocation3], %s48
      %s51 = sshll.u32 [#allocation5], 4
      %s52 = int_to_ptr.vmem [resolvable:$true] %s51
      %54 = dma.vmem_to_hbm [thread:$0]  %s52, 16, %s2, [#allocation3]
    $region17: #{tpu_custom_call.1} parent=1 // pred_fallthru
      _
    // Predicated region
    $region18: #{tpu_custom_call.1} parent=1 // pred_check
      _
    $region19: #{tpu_custom_call.1} parent=1 // pred_check_branch
      %56 = sbr.rel (0) target = $region21
    $region20: #{tpu_custom_call.1} parent=1 // pred_region
      %57 = dma.done [#allocation3], 16
    $region21: #{tpu_custom_call.1} parent=1 // pred_fallthru
      _
    %58 = vsyncpa [#allocation3], 1
    %59 = vsyncpa [#allocation4], 1

</llo_original>
